<compile_context>
chip_gen: v6e
topology: v6e:2x2x1
jax: 0.10.0
libtpu: 0.0.40
codegen_flags: <defaults>
</compile_context>

<pallas_src>
import functools

import jax
import jax.numpy as jnp
from jax.experimental import pallas as pl
from jax.experimental.pallas import tpu as pltpu

LANE = 128           # vreg lane width (last dim)
SUBLANE_F32 = 8      # f32 rows per vreg sublane group
SUBLANE_BF16 = 16    # 2-byte dtypes pack 16 rows per vreg sublane group


def _round_up(n, m):
    return ((n + m - 1) // m) * m


def _round_down(n, m):
    return (n // m) * m


def _pad2(a, rows, cols):
    pr, pc = rows - a.shape[0], cols - a.shape[1]
    if pr == 0 and pc == 0:
        return a
    return jnp.pad(a, ((0, pr), (0, pc)))


def _vmem_capacity_bytes():
    """Physical VMEM per TensorCore (generation-aware); conservative fallback."""
    try:
        return int(pltpu.get_tpu_info().vmem_capacity_bytes)
    except Exception:
        return 64 * 1024 * 1024   # v7x-sized fallback, safe on every generation


# --------------- fused 3-layer kernel (weights resident in VMEM) ------------

def mlp_kernel(x_ref, w1_ref, b1_ref, w2_ref, b2_ref, w3_ref, b3_ref, o_ref):
    # Layer 1: (tile_b, K) @ (K, H) on the MXU, f32 accumulation; bias+ReLU in f32.
    h1 = jnp.dot(x_ref[...], w1_ref[...], preferred_element_type=jnp.float32)
    h1 = jnp.maximum(h1 + b1_ref[...], 0.0)
    # Layer 2 (cast activations to the MXU/weight dtype only for the dot).
    h2 = jnp.dot(h1.astype(w2_ref.dtype), w2_ref[...],
                 preferred_element_type=jnp.float32)
    h2 = jnp.maximum(h2 + b2_ref[...], 0.0)
    # Layer 3: logits, no activation.
    logits = jnp.dot(h2.astype(w3_ref.dtype), w3_ref[...],
                     preferred_element_type=jnp.float32)
    o_ref[...] = (logits + b3_ref[...]).astype(o_ref.dtype)


# --------------- per-layer kernel (fallback when fused won't fit VMEM) ------

def _linear_kernel(x_ref, w_ref, b_ref, o_ref, *, relu):
    y = jnp.dot(x_ref[...], w_ref[...], preferred_element_type=jnp.float32)
    y = y + b_ref[...]
    if relu:
        y = jnp.maximum(y, 0.0)
    o_ref[...] = y.astype(o_ref.dtype)


def _linear_layer(x, w, b, *, relu, out_dtype, tile_b, tile_n, vmem_limit):
    Bx, K = x.shape
    N = w.shape[1]
    grid = (pl.cdiv(Bx, tile_b), pl.cdiv(N, tile_n))
    kernel = functools.partial(_linear_kernel, relu=relu)
    return pl.pallas_call(
        kernel,
        out_shape=jax.ShapeDtypeStruct((Bx, N), out_dtype),
        grid=grid,
        in_specs=[
            pl.BlockSpec((tile_b, K), lambda i, j: (i, 0)),     # x batch tile
            pl.BlockSpec((K, tile_n), lambda i, j: (0, j)),     # W column slab
            pl.BlockSpec((1, tile_n), lambda i, j: (0, j)),     # bias slab
        ],
        out_specs=pl.BlockSpec((tile_b, tile_n), lambda i, j: (i, j)),
        compiler_params=pltpu.CompilerParams(
            dimension_semantics=("parallel", "parallel"),
            vmem_limit_bytes=vmem_limit,
        ),
    )(x, w, b)


# --------------------------------- wrapper ----------------------------------

def neuralnet_forward(x, w1, b1, w2, b2, w3, b3, *, tile_b=512,
                      compute_dtype=jnp.bfloat16, out_dtype=None,
                      _force_per_layer=False):
    """Forward pass of NeuralNet: Linear->ReLU->Linear->ReLU->Linear.

    x:  (B, input_size)
    w1: (input_size, hidden),  b1: (1, hidden)   [W stored transposed vs torch]
    w2: (hidden, hidden),      b2: (1, hidden)
    w3: (hidden, num_classes), b3: (1, num_classes)

    compute_dtype: MXU operand dtype (bf16 default for peak MXU rate on every
                   generation); accumulation is always f32.
    """
    B, K = x.shape
    H = w1.shape[1]
    C = w3.shape[1]
    out_dtype = x.dtype if out_dtype is None else out_dtype
    compute_dtype = jnp.dtype(compute_dtype)
    cbytes = compute_dtype.itemsize
    obytes = jnp.dtype(out_dtype).itemsize

    # Lane-dense padded feature dims; batch tile aligned to the dtype's sublane
    # packing (16 rows/vreg for 2-byte dtypes, 8 for f32).
    kp, hp, cp = (_round_up(d, LANE) for d in (K, H, C))
    align = SUBLANE_BF16 if cbytes == 2 else SUBLANE_F32

    # Keep >= 2 grid steps when the batch allows it: pipelines x/out DMAs under
    # compute and lets "parallel" shard the batch across v7x's two TensorCores.
    b_aligned = _round_up(B, align)
    if b_aligned >= 2 * align:
        tile_cap = _round_down(b_aligned // 2, align)
    else:
        tile_cap = b_aligned
    tile_b = max(align, min(_round_up(tile_b, align), tile_cap))

    # Feature (lane-dim) padding only: zero-padded channels contribute 0 to
    # every dot product and padded logit columns are sliced off below.  The
    # batch axis stays unpadded -- the ragged last tile is handled by Pallas
    # block masking -- so there is no extra full HBM copy of x.
    xp = _pad2(x, B, kp).astype(compute_dtype)
    w1p = _pad2(w1, kp, hp).astype(compute_dtype)
    w2p = _pad2(w2, hp, hp).astype(compute_dtype)
    w3p = _pad2(w3, hp, cp).astype(compute_dtype)
    b1p = _pad2(b1, 1, hp).astype(jnp.float32)
    b2p = _pad2(b2, 1, hp).astype(jnp.float32)
    b3p = _pad2(b3, 1, cp).astype(jnp.float32)

    weight_bytes = ((w1p.size + w2p.size + w3p.size) * cbytes
                    + (b1p.size + b2p.size + b3p.size) * 4)

    # Generation-aware VMEM budget (128 MiB on v5e/v6e, 64 MiB on v7x), with
    # headroom for compiler scratch.
    capacity = _vmem_capacity_bytes()
    budget = int(0.85 * capacity)

    def fused_need(tb):
        # Single-buffered resident weights + double-buffered x/out tiles +
        # f32 h1/h2 intermediates + their compute-dtype cast copies.
        io = 2 * tb * (kp * cbytes + cp * obytes)
        interm = tb * hp * (2 * 4 + 2 * cbytes)
        return weight_bytes + io + interm

    # Shrink the batch tile (relevant for large H on v7x) until the fused
    # kernel fits the budget.
    while fused_need(tile_b) > budget and tile_b > align:
        tile_b = max(align, _round_down(tile_b // 2, align))

    if not _force_per_layer and fused_need(tile_b) <= budget:
        grid = (pl.cdiv(B, tile_b),)
        vmem_limit = int(min(max(int(1.25 * fused_need(tile_b)),
                                 32 * 1024 * 1024), budget))
        cost = pl.CostEstimate(
            flops=2 * B * (kp * hp + hp * hp + hp * cp),
            transcendentals=0,
            bytes_accessed=int(xp.size * cbytes + weight_bytes
                               + B * cp * obytes),
        )

        def rep(shape):
            # Replicated (non-batched) operand: constant index_map so the block
            # is fetched once and stays resident across the batch grid;
            # Buffered(1) disables the pointless double-buffering of a block
            # whose index never changes (halves resident-weight VMEM).
            return pl.BlockSpec(shape, lambda i: (0,) * len(shape),
                                pipeline_mode=pl.Buffered(1))

        out = pl.pallas_call(
            mlp_kernel,
            out_shape=jax.ShapeDtypeStruct((B, cp), out_dtype),
            grid=grid,
            in_specs=[
                pl.BlockSpec((tile_b, kp), lambda i: (i, 0)),   # x batch tile
                rep(w1p.shape), rep(b1p.shape),
                rep(w2p.shape), rep(b2p.shape),
                rep(w3p.shape), rep(b3p.shape),
            ],
            out_specs=pl.BlockSpec((tile_b, cp), lambda i: (i, 0)),
            compiler_params=pltpu.CompilerParams(
                dimension_semantics=("parallel",),
                vmem_limit_bytes=vmem_limit,
            ),
            cost_estimate=cost,
        )(xp, w1p, b1p, w2p, b2p, w3p, b3p)
        return out[:, :C]

    # Fallback for hidden sizes whose resident weights exceed the VMEM budget
    # (mainly v7x's 64 MiB/TC): one pallas_call per layer, blocking the output
    # columns so each layer's resident weight slab is (K, tile_n) regardless
    # of H.  Intermediates round-trip HBM in compute_dtype.
    # TODO(synk): int8 (v5e/v6e) / fp8 (v7x) weight quantization with
    # per-channel scales folded into the bias epilogue would halve weight
    # bandwidth again in this weight-BW-bound regime.
    tile_n = 512
    tile_b_fb = max(align, min(_round_down(256, align), b_aligned))
    h = _linear_layer(xp, w1p, b1p, relu=True, out_dtype=compute_dtype,
                      tile_b=tile_b_fb, tile_n=min(tile_n, hp),
                      vmem_limit=budget)
    h = _linear_layer(h, w2p, b2p, relu=True, out_dtype=compute_dtype,
                      tile_b=tile_b_fb, tile_n=min(tile_n, hp),
                      vmem_limit=budget)
    out = _linear_layer(h, w3p, b3p, relu=False, out_dtype=out_dtype,
                        tile_b=tile_b_fb, tile_n=min(tile_n, cp),
                        vmem_limit=budget)
    return out[:, :C]


def init_params(key, input_size, hidden_size, num_classes, dtype=jnp.float32):
    """Deterministic parameter init (PyTorch-style uniform +/- 1/sqrt(fan_in))."""
    ks = jax.random.split(key, 6)

    def linear(kw, kb, fan_in, fan_out):
        bound = 1.0 / jnp.sqrt(fan_in)
        w = jax.random.uniform(kw, (fan_in, fan_out), dtype, -bound, bound)
        b = jax.random.uniform(kb, (1, fan_out), dtype, -bound, bound)
        return w, b

    w1, b1 = linear(ks[0], ks[1], input_size, hidden_size)
    w2, b2 = linear(ks[2], ks[3], hidden_size, hidden_size)
    w3, b3 = linear(ks[4], ks[5], hidden_size, num_classes)
    return w1, b1, w2, b2, w3, b3


if __name__ == "__main__":
    # Small shapes consistent with NeuralNet(input_size, hidden, num_classes);
    # batch=128 gives a 2-step batch grid so the pipeline / megacore path is
    # exercised.
    batch, input_size, hidden_size, num_classes = 128, 32, 64, 16

    key = jax.random.PRNGKey(0)
    kx, kp = jax.random.split(key)
    x = jax.random.normal(kx, (batch, input_size), jnp.float32)
    params = init_params(kp, input_size, hidden_size, num_classes)
    w1, b1, w2, b2, w3, b3 = params

    # Reference in plain JAX (same math as the PyTorch module).
    ref = jnp.maximum(x @ w1 + b1, 0.0)
    ref = jnp.maximum(ref @ w2 + b2, 0.0)
    ref = ref @ w3 + b3

    # Fused path, f32 operands (exact check).
    out_f32 = neuralnet_forward(x, *params, compute_dtype=jnp.float32)
    jax.block_until_ready(out_f32)
    assert out_f32.shape == (batch, num_classes)
    assert jnp.allclose(out_f32, ref, atol=1e-5, rtol=1e-5)

    # Fused path, bf16 MXU operands (default): f32 accumulation, relaxed tol.
    out_bf16 = neuralnet_forward(x, *params)
    jax.block_until_ready(out_bf16)
    assert out_bf16.shape == (batch, num_classes)
    assert jnp.allclose(out_bf16, ref, atol=5e-2, rtol=5e-2)

    # Per-layer fallback path (used when resident weights exceed the VMEM
    # budget, e.g. very large hidden sizes on v7x) -- verified here too.
    out_fb = neuralnet_forward(x, *params, compute_dtype=jnp.float32,
                               _force_per_layer=True)
    jax.block_until_ready(out_fb)
    assert out_fb.shape == (batch, num_classes)
    assert jnp.allclose(out_fb, ref, atol=1e-5, rtol=1e-5)

    print("KERNEL_OK")
</pallas_src>

<mosaic_0001>
module attributes {stable_mosaic.version = 11 : i64} {
  func.func @mlp_kernel(%arg0: i32, %arg1: memref<64x128xf32, #tpu.memory_space<vmem>>, %arg2: memref<128x128xf32, #tpu.memory_space<vmem>>, %arg3: memref<1x128xf32, #tpu.memory_space<vmem>>, %arg4: memref<128x128xf32, #tpu.memory_space<vmem>>, %arg5: memref<1x128xf32, #tpu.memory_space<vmem>>, %arg6: memref<128x128xf32, #tpu.memory_space<vmem>>, %arg7: memref<1x128xf32, #tpu.memory_space<vmem>>, %arg8: memref<64x128xf32, #tpu.memory_space<vmem>>) attributes {dimension_semantics = [#tpu.dimension_semantics<parallel>], iteration_bounds = array<i64: 2>, scalar_prefetch = 0 : i64, scratch_operands = 0 : i64, tpu.core_type = #tpu.core_type<tc>, window_params = [{transform_indices = @transform_0, window_bounds = array<i64: 64, 128>}, {pipeline_mode = #tpu.pipeline_mode<synchronous>, transform_indices = @transform_1, window_bounds = array<i64: 128, 128>}, {pipeline_mode = #tpu.pipeline_mode<synchronous>, transform_indices = @transform_2, window_bounds = array<i64: 1, 128>}, {pipeline_mode = #tpu.pipeline_mode<synchronous>, transform_indices = @transform_3, window_bounds = array<i64: 128, 128>}, {pipeline_mode = #tpu.pipeline_mode<synchronous>, transform_indices = @transform_4, window_bounds = array<i64: 1, 128>}, {pipeline_mode = #tpu.pipeline_mode<synchronous>, transform_indices = @transform_5, window_bounds = array<i64: 128, 128>}, {pipeline_mode = #tpu.pipeline_mode<synchronous>, transform_indices = @transform_6, window_bounds = array<i64: 1, 128>}, {transform_indices = @transform_7, window_bounds = array<i64: 64, 128>}]} {
    %c0 = arith.constant 0 : index
    %c0_0 = arith.constant 0 : index
    %0 = vector.load %arg1[%c0, %c0_0] : memref<64x128xf32, #tpu.memory_space<vmem>>, vector<64x128xf32>
    %c0_1 = arith.constant 0 : index
    %c0_2 = arith.constant 0 : index
    %1 = vector.load %arg2[%c0_1, %c0_2] : memref<128x128xf32, #tpu.memory_space<vmem>>, vector<128x128xf32>
    %cst = arith.constant dense<0.000000e+00> : vector<64x128xf32>
    %2 = tpu.matmul %0, %1, %cst {dimension_numbers = #tpu.dot_dimension_numbers<[1], [0], [0], [1], [0, 0, 1, 1], [], []>} : vector<64x128xf32>, vector<128x128xf32>, vector<64x128xf32> -> vector<64x128xf32>
    %c0_3 = arith.constant 0 : index
    %c0_4 = arith.constant 0 : index
    %3 = vector.load %arg3[%c0_3, %c0_4] : memref<1x128xf32, #tpu.memory_space<vmem>>, vector<1x128xf32>
    %4 = vector.broadcast %3 : vector<1x128xf32> to vector<64x128xf32>
    %5 = arith.addf %2, %4 : vector<64x128xf32>
    %cst_5 = arith.constant 0.000000e+00 : f32
    %6 = vector.broadcast %cst_5 : f32 to vector<64x128xf32>
    %7 = arith.maximumf %5, %6 : vector<64x128xf32>
    %c0_6 = arith.constant 0 : index
    %c0_7 = arith.constant 0 : index
    %8 = vector.load %arg4[%c0_6, %c0_7] : memref<128x128xf32, #tpu.memory_space<vmem>>, vector<128x128xf32>
    %cst_8 = arith.constant dense<0.000000e+00> : vector<64x128xf32>
    %9 = tpu.matmul %7, %8, %cst_8 {dimension_numbers = #tpu.dot_dimension_numbers<[1], [0], [0], [1], [0, 0, 1, 1], [], []>} : vector<64x128xf32>, vector<128x128xf32>, vector<64x128xf32> -> vector<64x128xf32>
    %c0_9 = arith.constant 0 : index
    %c0_10 = arith.constant 0 : index
    %10 = vector.load %arg5[%c0_9, %c0_10] : memref<1x128xf32, #tpu.memory_space<vmem>>, vector<1x128xf32>
    %11 = vector.broadcast %10 : vector<1x128xf32> to vector<64x128xf32>
    %12 = arith.addf %9, %11 : vector<64x128xf32>
    %cst_11 = arith.constant 0.000000e+00 : f32
    %13 = vector.broadcast %cst_11 : f32 to vector<64x128xf32>
    %14 = arith.maximumf %12, %13 : vector<64x128xf32>
    %c0_12 = arith.constant 0 : index
    %c0_13 = arith.constant 0 : index
    %15 = vector.load %arg6[%c0_12, %c0_13] : memref<128x128xf32, #tpu.memory_space<vmem>>, vector<128x128xf32>
    %cst_14 = arith.constant dense<0.000000e+00> : vector<64x128xf32>
    %16 = tpu.matmul %14, %15, %cst_14 {dimension_numbers = #tpu.dot_dimension_numbers<[1], [0], [0], [1], [0, 0, 1, 1], [], []>} : vector<64x128xf32>, vector<128x128xf32>, vector<64x128xf32> -> vector<64x128xf32>
    %c0_15 = arith.constant 0 : index
    %c0_16 = arith.constant 0 : index
    %17 = vector.load %arg7[%c0_15, %c0_16] : memref<1x128xf32, #tpu.memory_space<vmem>>, vector<1x128xf32>
    %18 = vector.broadcast %17 : vector<1x128xf32> to vector<64x128xf32>
    %19 = arith.addf %16, %18 : vector<64x128xf32>
    %c0_17 = arith.constant 0 : index
    %c0_18 = arith.constant 0 : index
    %20 = vector.load %arg8[%c0_17, %c0_18] : memref<64x128xf32, #tpu.memory_space<vmem>>, vector<64x128xf32>
    tpu.vector_store %arg8[%c0_17, %c0_18], %19 {strides = array<i32>} : memref<64x128xf32, #tpu.memory_space<vmem>>, vector<64x128xf32>,
    return
  }
  func.func @transform_0(%arg0: i32) -> (i32, i32) {
    %c0_i32 = arith.constant 0 : i32
    %c0_i32_0 = arith.constant 0 : i32
    return %arg0, %c0_i32 : i32, i32
  }
  func.func @transform_1(%arg0: i32) -> (i32, i32) {
    %c0_i32 = arith.constant 0 : i32
    %c0_i32_0 = arith.constant 0 : i32
    %c0_i32_1 = arith.constant 0 : i32
    return %c0_i32, %c0_i32_0 : i32, i32
  }
  func.func @transform_2(%arg0: i32) -> (i32, i32) {
    %c0_i32 = arith.constant 0 : i32
    %c0_i32_0 = arith.constant 0 : i32
    %c0_i32_1 = arith.constant 0 : i32
    return %c0_i32, %c0_i32_0 : i32, i32
  }
  func.func @transform_3(%arg0: i32) -> (i32, i32) {
    %c0_i32 = arith.constant 0 : i32
    %c0_i32_0 = arith.constant 0 : i32
    %c0_i32_1 = arith.constant 0 : i32
    return %c0_i32, %c0_i32_0 : i32, i32
  }
  func.func @transform_4(%arg0: i32) -> (i32, i32) {
    %c0_i32 = arith.constant 0 : i32
    %c0_i32_0 = arith.constant 0 : i32
    %c0_i32_1 = arith.constant 0 : i32
    return %c0_i32, %c0_i32_0 : i32, i32
  }
  func.func @transform_5(%arg0: i32) -> (i32, i32) {
    %c0_i32 = arith.constant 0 : i32
    %c0_i32_0 = arith.constant 0 : i32
    %c0_i32_1 = arith.constant 0 : i32
    return %c0_i32, %c0_i32_0 : i32, i32
  }
  func.func @transform_6(%arg0: i32) -> (i32, i32) {
    %c0_i32 = arith.constant 0 : i32
    %c0_i32_0 = arith.constant 0 : i32
    %c0_i32_1 = arith.constant 0 : i32
    return %c0_i32, %c0_i32_0 : i32, i32
  }
  func.func @transform_7(%arg0: i32) -> (i32, i32) {
    %c0_i32 = arith.constant 0 : i32
    %c0_i32_0 = arith.constant 0 : i32
    return %arg0, %c0_i32 : i32, i32
  }
}

</mosaic_0001>

<llo_original>
// kernel: tpu_custom_call.1
$region0: #{tpu_custom_call.1}
  #allocation0 [shape = 'u32[]', space=smem, size = 0x4, offset = 0x4, fixed_abs, tag = 'smem constant byte address 0x4 - core index']
  #allocation1 [shape = 'u32[144,128]{1,0:T(1,128)}', space=vmem, size = 0x12000, scoped, tag = 'internal scratch']
  %s0 = inlined_call_operand.hbm [shape: f32[128,128], index: 0, kind: input, shape index: {}]
  %s1 = inlined_call_operand.hbm [shape: f32[128,128], index: 1, kind: input, shape index: {}]
  %s2 = inlined_call_operand.vmem [shape: f32[1,128], index: 2, kind: input, shape index: {}]
  %s3 = inlined_call_operand.hbm [shape: f32[128,128], index: 3, kind: input, shape index: {}]
  %s4 = inlined_call_operand.vmem [shape: f32[1,128], index: 4, kind: input, shape index: {}]
  %s5 = inlined_call_operand.hbm [shape: f32[128,128], index: 5, kind: input, shape index: {}]
  %s6 = inlined_call_operand.vmem [shape: f32[1,128], index: 6, kind: input, shape index: {}]
  %s7 = inlined_call_operand.hbm [shape: f32[128,128], index: 7, kind: output, shape index: {}]
  %s8 = sld [smem:[#allocation0]]
  $region77: #{tpu_custom_call.1} parent=0
    _
  %s10 = ssub.s32 1, %s8
  %s11 = scalar_select 0, %s10, %s8
  $region1: #{tpu_custom_call.1} parent=0
    #allocation2 [shape = 'u8[65536]{0}', space=vmem, size = 0x10000, scoped, tag = 'input window, operand 0']
    #allocation3 [shape = 's32[2]{0}', space=sflag, size = 0x8, scoped, tag = 'scoped memory for tpu_custom_call.1']
    #allocation4 [shape = 's32[2]{0}', space=sflag, size = 0x8, scoped, tag = 'scoped memory for tpu_custom_call.1']
    #allocation5 [shape = 'u8[65536]{0}', space=vmem, size = 0x10000, scoped, tag = 'input window, operand 1, single buffered']
    #allocation6 [shape = 's32[1]{0}', space=sflag, size = 0x4, scoped, tag = 'scoped memory for tpu_custom_call.1']
    #allocation7 [shape = 'u8[65536]{0}', space=vmem, size = 0x10000, scoped, tag = 'input window, operand 3, single buffered']
    #allocation8 [shape = 'u8[65536]{0}', space=vmem, size = 0x10000, scoped, tag = 'input window, operand 5, single buffered']
    #allocation9 [shape = 's32[1]{0}', space=sflag, size = 0x4, scoped, tag = 'scoped memory for tpu_custom_call.1']
    #allocation10 [shape = 'u8[65536]{0}', space=vmem, size = 0x10000, scoped, tag = 'output window, operand 0']
    %12 = vsyncpa [#allocation3], 0
    %s13 = scalar_lea.sflag [#allocation3], 1
    %14 = vsyncpa %s13, 0
    %15 = vsyncpa [#allocation6], 0
    %16 = vsyncpa [#allocation9], 0
    %17 = vsyncpa [#allocation4], 0
    %s18 = scalar_lea.sflag [#allocation4], 1
    %19 = vsyncpa %s18, 0
    loop: start=0, step=1, limit=4
    $region2: #{tpu_custom_call.1} parent=1 // loop_pre_header
      _
    $region3: #{tpu_custom_call.1} parent=1 // loop_header
      %s21 = sphi 0, %s25
      %p22 = scmp.ge.s32.totalorder %s21, 4
      %s31 = sphi 0, %s33
      %s34 = sphi 0, %s31
      %s35 = sphi 0, %s34
      %s51 = sphi 0, %s35
      %s55 = sphi 0, %s55
      %s57 = sphi 0, %s55
      %s58 = sphi 0, %s57
      %s72 = sphi 0, %s58
      %s76 = sphi 0, %s76
      %s78 = sphi 0, %s76
      %s79 = sphi 0, %s78
      %s93 = sphi 0, %s79
      %s97 = sphi 0, %s97
      %s99 = sphi 0, %s97
      %s100 = sphi 0, %s99
      %s114 = sphi 0, %s100
      %s118 = sphi 0, %s118
      %s120 = sphi 0, %s118
      %s121 = sphi 0, %s120
      %s135 = sphi 0, %s121
      %s139 = sphi 0, %s139
      %s141 = sphi 0, %s139
      %s142 = sphi 0, %s141
      %s156 = sphi 0, %s142
      %s160 = sphi 0, %s160
      %s162 = sphi 0, %s160
      %s163 = sphi 0, %s162
      %s177 = sphi 0, %s163
      %s183 = sphi 0, %s185
      %s186 = sphi 0, %s183
      %s187 = sphi 0, %s186
      %s203 = sphi 0, %s187
    $region4: #{tpu_custom_call.1} parent=1 // loop_header_branch
      %24 = sbr.rel (%p22) target = $region8
    $region5: #{tpu_custom_call.1} parent=1 // loop_body
      %s26 = ssub.s32 %s21, 1
      %s27 = ssub.s32 %s21, 2
      %s28 = sadd.s32 %s21, 1
      %s29 = ssub.s32 %s21, %s28
      %p30 = scmp.eq.s32.totalorder %s29, 0
      %s32 = sadd.s32 %s31, 1
      %s33 = scalar_select %p30, %s31, %s32
      %p36 = pneg %p30
      %p37 = scmp.eq.s32.totalorder %s21, 1
      %p38 = por %p36, %p37
      %p39 = scmp.ne.s32.totalorder %s31, %s34
      %p40 = scmp.eq.s32.totalorder %s21, 0
      %p41 = por %p39, %p40
      %p42 = scmp.ne.s32.totalorder %s31, %s34
      %p43 = scmp.eq.s32.totalorder %s26, 1
      %p44 = por %p42, %p43
      %p45 = scmp.ne.s32.totalorder %s34, %s35
      %p46 = scmp.eq.s32.totalorder %s26, 0
      %p47 = por %p45, %p46
      %p48 = scmp.ne.s32.totalorder %s34, %s35
      %p49 = scmp.eq.s32.totalorder %s27, 1
      %p50 = por %p48, %p49
      %p52 = scmp.ne.s32.totalorder %s35, %s51
      %p53 = scmp.eq.s32.totalorder %s27, 0
      %p54 = por %p52, %p53
      %s56 = sadd.s32 %s55, 1
      %p59 = scmp.eq.s32.totalorder %s21, 1
      %p60 = scmp.ne.s32.totalorder %s55, %s57
      %p61 = scmp.eq.s32.totalorder %s21, 0
      %p62 = por %p60, %p61
      %p63 = scmp.ne.s32.totalorder %s55, %s57
      %p64 = scmp.eq.s32.totalorder %s26, 1
      %p65 = por %p63, %p64
      %p66 = scmp.ne.s32.totalorder %s57, %s58
      %p67 = scmp.eq.s32.totalorder %s26, 0
      %p68 = por %p66, %p67
      %p69 = scmp.ne.s32.totalorder %s57, %s58
      %p70 = scmp.eq.s32.totalorder %s27, 1
      %p71 = por %p69, %p70
      %p73 = scmp.ne.s32.totalorder %s58, %s72
      %p74 = scmp.eq.s32.totalorder %s27, 0
      %p75 = por %p73, %p74
      %s77 = sadd.s32 %s76, 1
      %p80 = scmp.eq.s32.totalorder %s21, 1
      %p81 = scmp.ne.s32.totalorder %s76, %s78
      %p82 = scmp.eq.s32.totalorder %s21, 0
      %p83 = por %p81, %p82
      %p84 = scmp.ne.s32.totalorder %s76, %s78
      %p85 = scmp.eq.s32.totalorder %s26, 1
      %p86 = por %p84, %p85
      %p87 = scmp.ne.s32.totalorder %s78, %s79
      %p88 = scmp.eq.s32.totalorder %s26, 0
      %p89 = por %p87, %p88
      %p90 = scmp.ne.s32.totalorder %s78, %s79
      %p91 = scmp.eq.s32.totalorder %s27, 1
      %p92 = por %p90, %p91
      %p94 = scmp.ne.s32.totalorder %s79, %s93
      %p95 = scmp.eq.s32.totalorder %s27, 0
      %p96 = por %p94, %p95
      %s98 = sadd.s32 %s97, 1
      %p101 = scmp.eq.s32.totalorder %s21, 1
      %p102 = scmp.ne.s32.totalorder %s97, %s99
      %p103 = scmp.eq.s32.totalorder %s21, 0
      %p104 = por %p102, %p103
      %p105 = scmp.ne.s32.totalorder %s97, %s99
      %p106 = scmp.eq.s32.totalorder %s26, 1
      %p107 = por %p105, %p106
      %p108 = scmp.ne.s32.totalorder %s99, %s100
      %p109 = scmp.eq.s32.totalorder %s26, 0
      %p110 = por %p108, %p109
      %p111 = scmp.ne.s32.totalorder %s99, %s100
      %p112 = scmp.eq.s32.totalorder %s27, 1
      %p113 = por %p111, %p112
      %p115 = scmp.ne.s32.totalorder %s100, %s114
      %p116 = scmp.eq.s32.totalorder %s27, 0
      %p117 = por %p115, %p116
      %s119 = sadd.s32 %s118, 1
      %p122 = scmp.eq.s32.totalorder %s21, 1
      %p123 = scmp.ne.s32.totalorder %s118, %s120
      %p124 = scmp.eq.s32.totalorder %s21, 0
      %p125 = por %p123, %p124
      %p126 = scmp.ne.s32.totalorder %s118, %s120
      %p127 = scmp.eq.s32.totalorder %s26, 1
      %p128 = por %p126, %p127
      %p129 = scmp.ne.s32.totalorder %s120, %s121
      %p130 = scmp.eq.s32.totalorder %s26, 0
      %p131 = por %p129, %p130
      %p132 = scmp.ne.s32.totalorder %s120, %s121
      %p133 = scmp.eq.s32.totalorder %s27, 1
      %p134 = por %p132, %p133
      %p136 = scmp.ne.s32.totalorder %s121, %s135
      %p137 = scmp.eq.s32.totalorder %s27, 0
      %p138 = por %p136, %p137
      %s140 = sadd.s32 %s139, 1
      %p143 = scmp.eq.s32.totalorder %s21, 1
      %p144 = scmp.ne.s32.totalorder %s139, %s141
      %p145 = scmp.eq.s32.totalorder %s21, 0
      %p146 = por %p144, %p145
      %p147 = scmp.ne.s32.totalorder %s139, %s141
      %p148 = scmp.eq.s32.totalorder %s26, 1
      %p149 = por %p147, %p148
      %p150 = scmp.ne.s32.totalorder %s141, %s142
      %p151 = scmp.eq.s32.totalorder %s26, 0
      %p152 = por %p150, %p151
      %p153 = scmp.ne.s32.totalorder %s141, %s142
      %p154 = scmp.eq.s32.totalorder %s27, 1
      %p155 = por %p153, %p154
      %p157 = scmp.ne.s32.totalorder %s142, %s156
      %p158 = scmp.eq.s32.totalorder %s27, 0
      %p159 = por %p157, %p158
      %s161 = sadd.s32 %s160, 1
      %p164 = scmp.eq.s32.totalorder %s21, 1
      %p165 = scmp.ne.s32.totalorder %s160, %s162
      %p166 = scmp.eq.s32.totalorder %s21, 0
      %p167 = por %p165, %p166
      %p168 = scmp.ne.s32.totalorder %s160, %s162
      %p169 = scmp.eq.s32.totalorder %s26, 1
      %p170 = por %p168, %p169
      %p171 = scmp.ne.s32.totalorder %s162, %s163
      %p172 = scmp.eq.s32.totalorder %s26, 0
      %p173 = por %p171, %p172
      %p174 = scmp.ne.s32.totalorder %s162, %s163
      %p175 = scmp.eq.s32.totalorder %s27, 1
      %p176 = por %p174, %p175
      %p178 = scmp.ne.s32.totalorder %s163, %s177
      %p179 = scmp.eq.s32.totalorder %s27, 0
      %p180 = por %p178, %p179
      %s181 = ssub.s32 %s21, %s28
      %p182 = scmp.eq.s32.totalorder %s181, 0
      %s184 = sadd.s32 %s183, 1
      %s185 = scalar_select %p182, %s183, %s184
      %p188 = pneg %p182
      %p189 = scmp.eq.s32.totalorder %s21, 1
      %p190 = por %p188, %p189
      %p191 = scmp.ne.s32.totalorder %s183, %s186
      %p192 = scmp.eq.s32.totalorder %s21, 0
      %p193 = por %p191, %p192
      %p194 = scmp.ne.s32.totalorder %s183, %s186
      %p195 = scmp.eq.s32.totalorder %s26, 1
      %p196 = por %p194, %p195
      %p197 = scmp.ne.s32.totalorder %s186, %s187
      %p198 = scmp.eq.s32.totalorder %s26, 0
      %p199 = por %p197, %p198
      %p200 = scmp.ne.s32.totalorder %s186, %s187
      %p201 = scmp.eq.s32.totalorder %s27, 1
      %p202 = por %p200, %p201
      %p204 = scmp.ne.s32.totalorder %s187, %s203
      %p205 = scmp.eq.s32.totalorder %s27, 0
      %p206 = por %p204, %p205
      %p207 = scmp.le.s32.totalorder 1, %s21
      %p208 = scmp.lt.s32.totalorder %s21, 3
      %p209 = pnand %p207, %p208
      %p210 = pneg %p209
      // Predicated region
      $region9: #{tpu_custom_call.1} parent=5 // pred_check
        _
      $region10: #{tpu_custom_call.1} parent=5 // pred_check_branch
        %212 = sbr.rel (%p209) target = $region12
      $region11: #{tpu_custom_call.1} parent=5 // pred_region
        %s213 = ssub.s32 %s21, 1
        // Predicated region
        $region13: #{tpu_custom_call.1} parent=11 // pred_check
          %p214 = pneg %p68
        $region14: #{tpu_custom_call.1} parent=11 // pred_check_branch
          %216 = sbr.rel (%p214) target = $region16
        $region15: #{tpu_custom_call.1} parent=11 // pred_region
          %s218 = ssub.s32 2048, 2048
          %219 = vsyncadd [#allocation6], %s218
          %s220 = sshll.u32 [#allocation5], 4
          %s221 = int_to_ptr.vmem [resolvable:$true] %s220
          %226 = dma.hbm_to_vmem [thread:$0]  %s1, 2048, %s221, [#allocation6], 128, 128, 8
        $region16: #{tpu_custom_call.1} parent=11 // pred_fallthru
          _
        // Predicated region
        $region17: #{tpu_custom_call.1} parent=11 // pred_check
          %p227 = pneg %p89
        $region18: #{tpu_custom_call.1} parent=11 // pred_check_branch
          %229 = sbr.rel (%p227) target = $region20
        $region19: #{tpu_custom_call.1} parent=11 // pred_region
          _
        $region20: #{tpu_custom_call.1} parent=11 // pred_fallthru
          _
        // Predicated region
        $region21: #{tpu_custom_call.1} parent=11 // pred_check
          %p230 = pneg %p110
        $region22: #{tpu_custom_call.1} parent=11 // pred_check_branch
          %232 = sbr.rel (%p230) target = $region24
        $region23: #{tpu_custom_call.1} parent=11 // pred_region
          %s234 = ssub.s32 2048, 2048
          %235 = vsyncadd [#allocation6], %s234
          %s236 = sshll.u32 [#allocation7], 4
          %s237 = int_to_ptr.vmem [resolvable:$true] %s236
          %242 = dma.hbm_to_vmem [thread:$0]  %s3, 2048, %s237, [#allocation6], 128, 128, 8
        $region24: #{tpu_custom_call.1} parent=11 // pred_fallthru
          _
        // Predicated region
        $region25: #{tpu_custom_call.1} parent=11 // pred_check
          %p243 = pneg %p131
        $region26: #{tpu_custom_call.1} parent=11 // pred_check_branch
          %245 = sbr.rel (%p243) target = $region28
        $region27: #{tpu_custom_call.1} parent=11 // pred_region
          _
        $region28: #{tpu_custom_call.1} parent=11 // pred_fallthru
          _
        // Predicated region
        $region29: #{tpu_custom_call.1} parent=11 // pred_check
          %p246 = pneg %p152
        $region30: #{tpu_custom_call.1} parent=11 // pred_check_branch
          %248 = sbr.rel (%p246) target = $region32
        $region31: #{tpu_custom_call.1} parent=11 // pred_region
          %s250 = ssub.s32 2048, 2048
          %251 = vsyncadd [#allocation9], %s250
          %s252 = sshll.u32 [#allocation8], 4
          %s253 = int_to_ptr.vmem [resolvable:$true] %s252
          %258 = dma.hbm_to_vmem [thread:$0]  %s5, 2048, %s253, [#allocation9], 128, 128, 8
        $region32: #{tpu_custom_call.1} parent=11 // pred_fallthru
          _
        // Predicated region
        $region33: #{tpu_custom_call.1} parent=11 // pred_check
          %p259 = pneg %p173
        $region34: #{tpu_custom_call.1} parent=11 // pred_check_branch
          %261 = sbr.rel (%p259) target = $region36
        $region35: #{tpu_custom_call.1} parent=11 // pred_region
          _
        $region36: #{tpu_custom_call.1} parent=11 // pred_fallthru
          _
      $region12: #{tpu_custom_call.1} parent=5 // pred_fallthru
        _
      %p262 = scmp.lt.s32.totalorder %s21, 2
      // Predicated region
      $region37: #{tpu_custom_call.1} parent=5 // pred_check
        %p263 = pneg %p262
      $region38: #{tpu_custom_call.1} parent=5 // pred_check_branch
        %265 = sbr.rel (%p263) target = $region40
      $region39: #{tpu_custom_call.1} parent=5 // pred_region
        // Predicated region
        $region41: #{tpu_custom_call.1} parent=39 // pred_check
          %p266 = pneg %p41
        $region42: #{tpu_custom_call.1} parent=39 // pred_check_branch
          %268 = sbr.rel (%p266) target = $region44
        $region43: #{tpu_custom_call.1} parent=39 // pred_region
          %s269 = sand.u32 %s31, 1
          %s270 = scalar_lea.sflag [#allocation3], %s269
          %s271 = sand.u32 %s31, 1
          %s272 = smul.addr %s271, 64
          %s273 = scalar_lea.vmem [#allocation2], %s272
          %s274 = smul.u32 8, %s21
          %s276 = ssub.s32 1024, 1024
          %277 = vsyncadd %s270, %s276
          %s278 = smul.addr %s274, 128
          %s279 = scalar_lea.hbm %s0, %s278
          %s280 = sshll.u32 %s273, 4
          %s281 = int_to_ptr.vmem [resolvable:$true] %s280
          %286 = dma.hbm_to_vmem [thread:$0]  %s279, 1024, %s281, %s270, 128, 128, 8
        $region44: #{tpu_custom_call.1} parent=39 // pred_fallthru
          _
      $region40: #{tpu_custom_call.1} parent=5 // pred_fallthru
        _
      %p287 = scmp.le.s32.totalorder 1, %s21
      %p288 = scmp.lt.s32.totalorder %s21, 3
      %p289 = pnand %p287, %p288
      %p290 = pneg %p289
      // Predicated region
      $region45: #{tpu_custom_call.1} parent=5 // pred_check
        _
      $region46: #{tpu_custom_call.1} parent=5 // pred_check_branch
        %292 = sbr.rel (%p289) target = $region48
      $region47: #{tpu_custom_call.1} parent=5 // pred_region
        %s293 = ssub.s32 %s21, 1
        %s294 = sand.u32 %s34, 1
        %s295 = scalar_lea.sflag [#allocation3], %s294
        %s296 = sand.u32 %s34, 1
        %s297 = smul.addr %s296, 64
        %s298 = scalar_lea.vmem [#allocation2], %s297
        // Predicated region
        $region49: #{tpu_custom_call.1} parent=47 // pred_check
          %p299 = pneg %p47
        $region50: #{tpu_custom_call.1} parent=47 // pred_check_branch
          %301 = sbr.rel (%p299) target = $region52
        $region51: #{tpu_custom_call.1} parent=47 // pred_region
          %302 = dma.done %s295, 1024
        $region52: #{tpu_custom_call.1} parent=47 // pred_fallthru
          _
        // Predicated region
        $region53: #{tpu_custom_call.1} parent=47 // pred_check
          %p303 = pneg %p68
        $region54: #{tpu_custom_call.1} parent=47 // pred_check_branch
          %305 = sbr.rel (%p303) target = $region56
        $region55: #{tpu_custom_call.1} parent=47 // pred_region
          %306 = dma.done [#allocation6], 2048
        $region56: #{tpu_custom_call.1} parent=47 // pred_fallthru
          _
        // Predicated region
        $region57: #{tpu_custom_call.1} parent=47 // pred_check
          %p307 = pneg %p110
        $region58: #{tpu_custom_call.1} parent=47 // pred_check_branch
          %309 = sbr.rel (%p307) target = $region60
        $region59: #{tpu_custom_call.1} parent=47 // pred_region
          %310 = dma.done [#allocation6], 2048
        $region60: #{tpu_custom_call.1} parent=47 // pred_fallthru
          _
        // Predicated region
        $region61: #{tpu_custom_call.1} parent=47 // pred_check
          %p311 = pneg %p152
        $region62: #{tpu_custom_call.1} parent=47 // pred_check_branch
          %313 = sbr.rel (%p311) target = $region64
        $region63: #{tpu_custom_call.1} parent=47 // pred_region
          %314 = dma.done [#allocation9], 2048
        $region64: #{tpu_custom_call.1} parent=47 // pred_fallthru
          _
        %s315 = sand.u32 %s34, 1
        %s316 = scalar_lea.sflag [#allocation3], %s315
        %s317 = sand.u32 %s34, 1
        %s318 = smul.addr %s317, 64
        %s319 = scalar_lea.vmem [#allocation2], %s318
        %p320 = pneg %p47
        %p321 = pneg %p44
        %p322 = pneg %p68
        %p323 = pneg %p65
        %p324 = pneg %p89
        %p325 = pneg %p86
        %p326 = pneg %p110
        %p327 = pneg %p107
        %p328 = pneg %p131
        %p329 = pneg %p128
        %p330 = pneg %p152
        %p331 = pneg %p149
        %p332 = pneg %p173
        %p333 = pneg %p170
        %p334 = pneg %p199
        %p335 = pneg %p196
        %s336 = sand.u32 %s186, 1
        %s337 = scalar_lea.sflag [#allocation4], %s336
        %s338 = sand.u32 %s186, 1
        %s339 = smul.addr %s338, 64
        %s340 = scalar_lea.vmem [#allocation10], %s339
        %s341 = smul.u32 8, %s26
        %s342 = smul.u32 8, %s26
        %v343 = vld [vmem:[%s298] sm:$0xff]
        %v344 = vld [vmem:[%s298 + $0x8] sm:$0xff]
        %v345 = vld [vmem:[%s298 + $0x10] sm:$0xff]
        %v346 = vld [vmem:[%s298 + $0x18] sm:$0xff]
        %v347 = vld [vmem:[%s298 + $0x20] sm:$0xff]
        %v348 = vld [vmem:[%s298 + $0x28] sm:$0xff]
        %v349 = vld [vmem:[%s298 + $0x30] sm:$0xff]
        %v350 = vld [vmem:[%s298 + $0x38] sm:$0xff]
        %v351 = vld [vmem:[#allocation5] sm:$0xff]
        %v352 = vld [vmem:[#allocation5 + $0x8] sm:$0xff]
        %v353 = vld [vmem:[#allocation5 + $0x10] sm:$0xff]
        %v354 = vld [vmem:[#allocation5 + $0x18] sm:$0xff]
        %v355 = vld [vmem:[#allocation5 + $0x20] sm:$0xff]
        %v356 = vld [vmem:[#allocation5 + $0x28] sm:$0xff]
        %v357 = vld [vmem:[#allocation5 + $0x30] sm:$0xff]
        %v358 = vld [vmem:[#allocation5 + $0x38] sm:$0xff]
        %v359 = vld [vmem:[#allocation5 + $0x40] sm:$0xff]
        %v360 = vld [vmem:[#allocation5 + $0x48] sm:$0xff]
        %v361 = vld [vmem:[#allocation5 + $0x50] sm:$0xff]
        %v362 = vld [vmem:[#allocation5 + $0x58] sm:$0xff]
        %v363 = vld [vmem:[#allocation5 + $0x60] sm:$0xff]
        %v364 = vld [vmem:[#allocation5 + $0x68] sm:$0xff]
        %v365 = vld [vmem:[#allocation5 + $0x70] sm:$0xff]
        %v366 = vld [vmem:[#allocation5 + $0x78] sm:$0xff]
        %v367 = vld [vmem:[%s2] sm:$0x1]
        %v369 = vlaneseq
        %v370 = vshrl.u32 %v369, 7
        %v371 = vsub.s32 0, %v370
        %v372 = vrot.slane %v367, %v371
        %374 = vmatprep.subr.mxu0 0.0
        %375 = vmatpush1.msra.mxu0 %v366
        %376 = vmatprep.subr.mxu0 0.0
        %377 = vmatpush1.msra.mxu0 %v365
        %378 = vmatprep.subr.mxu0 0.0
        %379 = vmatpush1.msra.mxu0 %v364
        %380 = vmatprep.subr.mxu0 0.0
        %381 = vmatpush1.msra.mxu0 %v363
        %382 = vmatprep.subr.mxu0 0.0
        %383 = vmatpush1.msra.mxu0 %v362
        %384 = vmatprep.subr.mxu0 0.0
        %385 = vmatpush1.msra.mxu0 %v361
        %386 = vmatprep.subr.mxu0 0.0
        %387 = vmatpush1.msra.mxu0 %v360
        %388 = vmatprep.subr.mxu0 0.0
        %389 = vmatpush1.msra.mxu0 %v359
        %390 = vmatprep.subr.mxu0 0.0
        %391 = vmatpush1.msra.mxu0 %v358
        %392 = vmatprep.subr.mxu0 0.0
        %393 = vmatpush1.msra.mxu0 %v357
        %394 = vmatprep.subr.mxu0 0.0
        %395 = vmatpush1.msra.mxu0 %v356
        %396 = vmatprep.subr.mxu0 0.0
        %397 = vmatpush1.msra.mxu0 %v355
        %398 = vmatprep.subr.mxu0 0.0
        %399 = vmatpush1.msra.mxu0 %v354
        %400 = vmatprep.subr.mxu0 0.0
        %401 = vmatpush1.msra.mxu0 %v353
        %402 = vmatprep.subr.mxu0 0.0
        %403 = vmatpush1.msra.mxu0 %v352
        %404 = vmatprep.subr.mxu0 0.0
        %405 = vmatpush1.msra.mxu0 %v351
        %406 = vmatprep.subr.mxu0 0.0
        %407 = vmatpush2.msra.mxu0 0.0
        %408 = vmatprep.subr.mxu0 0.0
        %409 = vmatpush2.msra.mxu0 0.0
        %410 = vmatprep.subr.mxu0 0.0
        %411 = vmatpush2.msra.mxu0 0.0
        %412 = vmatprep.subr.mxu0 0.0
        %413 = vmatpush2.msra.mxu0 0.0
        %414 = vmatprep.subr.mxu0 0.0
        %415 = vmatpush2.msra.mxu0 0.0
        %416 = vmatprep.subr.mxu0 0.0
        %417 = vmatpush2.msra.mxu0 0.0
        %418 = vmatprep.subr.mxu0 0.0
        %419 = vmatpush2.msra.mxu0 0.0
        %420 = vmatprep.subr.mxu0 0.0
        %421 = vmatpush2.msra.mxu0 0.0
        %422 = vmatprep.subr.mxu0 0.0
        %423 = vmatpush2.msra.mxu0 0.0
        %424 = vmatprep.subr.mxu0 0.0
        %425 = vmatpush2.msra.mxu0 0.0
        %426 = vmatprep.subr.mxu0 0.0
        %427 = vmatpush2.msra.mxu0 0.0
        %428 = vmatprep.subr.mxu0 0.0
        %429 = vmatpush2.msra.mxu0 0.0
        %430 = vmatprep.subr.mxu0 0.0
        %431 = vmatpush2.msra.mxu0 0.0
        %432 = vmatprep.subr.mxu0 0.0
        %433 = vmatpush2.msra.mxu0 0.0
        %434 = vmatprep.subr.mxu0 0.0
        %435 = vmatpush2.msra.mxu0 0.0
        %436 = vmatprep.subr.mxu0 0.0
        %437 = vmatpush2.msra.mxu0 0.0
        %438 = vmatprep.mubr.f32.mxu0 0.0
        %439 = vmatmul.mubr.f32.gmra.mxu0 %v343
        %v440 = vpop.f32.mrf.mxu0
        %v441 = vadd.f32 %v372, %v440
        %v442 = vpop.f32.mrf.mxu0
        %443 = vmatprep.mubr.f32.mxu0 0.0
        %444 = vmatmul.mubr.f32.gmra.mxu0 %v344
        %v445 = vpop.f32.mrf.mxu0
        %v446 = vadd.f32 %v372, %v445
        %v447 = vpop.f32.mrf.mxu0
        %448 = vmatprep.mubr.f32.mxu0 0.0
        %449 = vmatmul.mubr.f32.gmra.mxu0 %v345
        %v450 = vpop.f32.mrf.mxu0
        %v451 = vadd.f32 %v372, %v450
        %v452 = vpop.f32.mrf.mxu0
        %453 = vmatprep.mubr.f32.mxu0 0.0
        %454 = vmatmul.mubr.f32.gmra.mxu0 %v346
        %v455 = vpop.f32.mrf.mxu0
        %v456 = vadd.f32 %v372, %v455
        %v457 = vpop.f32.mrf.mxu0
        %458 = vmatprep.mubr.f32.mxu0 0.0
        %459 = vmatmul.mubr.f32.gmra.mxu0 %v347
        %v460 = vpop.f32.mrf.mxu0
        %v461 = vadd.f32 %v372, %v460
        %v462 = vpop.f32.mrf.mxu0
        %463 = vmatprep.mubr.f32.mxu0 0.0
        %464 = vmatmul.mubr.f32.gmra.mxu0 %v348
        %v465 = vpop.f32.mrf.mxu0
        %v466 = vadd.f32 %v372, %v465
        %v467 = vpop.f32.mrf.mxu0
        %468 = vmatprep.mubr.f32.mxu0 0.0
        %469 = vmatmul.mubr.f32.gmra.mxu0 %v349
        %v470 = vpop.f32.mrf.mxu0
        %v471 = vadd.f32 %v372, %v470
        %v472 = vpop.f32.mrf.mxu0
        %473 = vmatprep.mubr.f32.mxu0 0.0
        %474 = vmatmul.mubr.f32.gmra.mxu0 %v350
        %v475 = vpop.f32.mrf.mxu0
        %v476 = vadd.f32 %v372, %v475
        %v477 = vpop.f32.mrf.mxu0
        %478 = vdwg.mxu0
        %v479 = vmax.f32 %v441, 0.0
        %v480 = vmax.f32 %v446, 0.0
        %v481 = vmax.f32 %v451, 0.0
        %v482 = vmax.f32 %v456, 0.0
        %v483 = vmax.f32 %v461, 0.0
        %v484 = vmax.f32 %v466, 0.0
        %v485 = vmax.f32 %v471, 0.0
        %v486 = vmax.f32 %v476, 0.0
        %v487 = vld [vmem:[#allocation7] sm:$0xff]
        %v488 = vld [vmem:[#allocation7 + $0x8] sm:$0xff]
        %v489 = vld [vmem:[#allocation7 + $0x10] sm:$0xff]
        %v490 = vld [vmem:[#allocation7 + $0x18] sm:$0xff]
        %v491 = vld [vmem:[#allocation7 + $0x20] sm:$0xff]
        %v492 = vld [vmem:[#allocation7 + $0x28] sm:$0xff]
        %v493 = vld [vmem:[#allocation7 + $0x30] sm:$0xff]
        %v494 = vld [vmem:[#allocation7 + $0x38] sm:$0xff]
        %v495 = vld [vmem:[#allocation7 + $0x40] sm:$0xff]
        %v496 = vld [vmem:[#allocation7 + $0x48] sm:$0xff]
        %v497 = vld [vmem:[#allocation7 + $0x50] sm:$0xff]
        %v498 = vld [vmem:[#allocation7 + $0x58] sm:$0xff]
        %v499 = vld [vmem:[#allocation7 + $0x60] sm:$0xff]
        %v500 = vld [vmem:[#allocation7 + $0x68] sm:$0xff]
        %v501 = vld [vmem:[#allocation7 + $0x70] sm:$0xff]
        %v502 = vld [vmem:[#allocation7 + $0x78] sm:$0xff]
        %v503 = vld [vmem:[%s4] sm:$0x1]
        %v505 = vlaneseq
        %v506 = vshrl.u32 %v505, 7
        %v507 = vsub.s32 0, %v506
        %v508 = vrot.slane %v503, %v507
        %510 = vmatprep.subr.mxu0 0.0
        %511 = vmatpush1.msra.mxu0 %v502
        %512 = vmatprep.subr.mxu0 0.0
        %513 = vmatpush1.msra.mxu0 %v501
        %514 = vmatprep.subr.mxu0 0.0
        %515 = vmatpush1.msra.mxu0 %v500
        %516 = vmatprep.subr.mxu0 0.0
        %517 = vmatpush1.msra.mxu0 %v499
        %518 = vmatprep.subr.mxu0 0.0
        %519 = vmatpush1.msra.mxu0 %v498
        %520 = vmatprep.subr.mxu0 0.0
        %521 = vmatpush1.msra.mxu0 %v497
        %522 = vmatprep.subr.mxu0 0.0
        %523 = vmatpush1.msra.mxu0 %v496
        %524 = vmatprep.subr.mxu0 0.0
        %525 = vmatpush1.msra.mxu0 %v495
        %526 = vmatprep.subr.mxu0 0.0
        %527 = vmatpush1.msra.mxu0 %v494
        %528 = vmatprep.subr.mxu0 0.0
        %529 = vmatpush1.msra.mxu0 %v493
        %530 = vmatprep.subr.mxu0 0.0
        %531 = vmatpush1.msra.mxu0 %v492
        %532 = vmatprep.subr.mxu0 0.0
        %533 = vmatpush1.msra.mxu0 %v491
        %534 = vmatprep.subr.mxu0 0.0
        %535 = vmatpush1.msra.mxu0 %v490
        %536 = vmatprep.subr.mxu0 0.0
        %537 = vmatpush1.msra.mxu0 %v489
        %538 = vmatprep.subr.mxu0 0.0
        %539 = vmatpush1.msra.mxu0 %v488
        %540 = vmatprep.subr.mxu0 0.0
        %541 = vmatpush1.msra.mxu0 %v487
        %542 = vmatprep.subr.mxu0 0.0
        %543 = vmatpush2.msra.mxu0 0.0
        %544 = vmatprep.subr.mxu0 0.0
        %545 = vmatpush2.msra.mxu0 0.0
        %546 = vmatprep.subr.mxu0 0.0
        %547 = vmatpush2.msra.mxu0 0.0
        %548 = vmatprep.subr.mxu0 0.0
        %549 = vmatpush2.msra.mxu0 0.0
        %550 = vmatprep.subr.mxu0 0.0
        %551 = vmatpush2.msra.mxu0 0.0
        %552 = vmatprep.subr.mxu0 0.0
        %553 = vmatpush2.msra.mxu0 0.0
        %554 = vmatprep.subr.mxu0 0.0
        %555 = vmatpush2.msra.mxu0 0.0
        %556 = vmatprep.subr.mxu0 0.0
        %557 = vmatpush2.msra.mxu0 0.0
        %558 = vmatprep.subr.mxu0 0.0
        %559 = vmatpush2.msra.mxu0 0.0
        %560 = vmatprep.subr.mxu0 0.0
        %561 = vmatpush2.msra.mxu0 0.0
        %562 = vmatprep.subr.mxu0 0.0
        %563 = vmatpush2.msra.mxu0 0.0
        %564 = vmatprep.subr.mxu0 0.0
        %565 = vmatpush2.msra.mxu0 0.0
        %566 = vmatprep.subr.mxu0 0.0
        %567 = vmatpush2.msra.mxu0 0.0
        %568 = vmatprep.subr.mxu0 0.0
        %569 = vmatpush2.msra.mxu0 0.0
        %570 = vmatprep.subr.mxu0 0.0
        %571 = vmatpush2.msra.mxu0 0.0
        %572 = vmatprep.subr.mxu0 0.0
        %573 = vmatpush2.msra.mxu0 0.0
        %574 = vmatprep.mubr.f32.mxu0 0.0
        %575 = vmatmul.mubr.f32.gmra.mxu0 %v479
        %v576 = vpop.f32.mrf.mxu0
        %v577 = vadd.f32 %v508, %v576
        %v578 = vpop.f32.mrf.mxu0
        %579 = vmatprep.mubr.f32.mxu0 0.0
        %580 = vmatmul.mubr.f32.gmra.mxu0 %v480
        %v581 = vpop.f32.mrf.mxu0
        %v582 = vadd.f32 %v508, %v581
        %v583 = vpop.f32.mrf.mxu0
        %584 = vmatprep.mubr.f32.mxu0 0.0
        %585 = vmatmul.mubr.f32.gmra.mxu0 %v481
        %v586 = vpop.f32.mrf.mxu0
        %v587 = vadd.f32 %v508, %v586
        %v588 = vpop.f32.mrf.mxu0
        %589 = vmatprep.mubr.f32.mxu0 0.0
        %590 = vmatmul.mubr.f32.gmra.mxu0 %v482
        %v591 = vpop.f32.mrf.mxu0
        %v592 = vadd.f32 %v508, %v591
        %v593 = vpop.f32.mrf.mxu0
        %594 = vmatprep.mubr.f32.mxu0 0.0
        %595 = vmatmul.mubr.f32.gmra.mxu0 %v483
        %v596 = vpop.f32.mrf.mxu0
        %v597 = vadd.f32 %v508, %v596
        %v598 = vpop.f32.mrf.mxu0
        %599 = vmatprep.mubr.f32.mxu0 0.0
        %600 = vmatmul.mubr.f32.gmra.mxu0 %v484
        %v601 = vpop.f32.mrf.mxu0
        %v602 = vadd.f32 %v508, %v601
        %v603 = vpop.f32.mrf.mxu0
        %604 = vmatprep.mubr.f32.mxu0 0.0
        %605 = vmatmul.mubr.f32.gmra.mxu0 %v485
        %v606 = vpop.f32.mrf.mxu0
        %v607 = vadd.f32 %v508, %v606
        %v608 = vpop.f32.mrf.mxu0
        %609 = vmatprep.mubr.f32.mxu0 0.0
        %610 = vmatmul.mubr.f32.gmra.mxu0 %v486
        %v611 = vpop.f32.mrf.mxu0
        %v612 = vadd.f32 %v508, %v611
        %v613 = vpop.f32.mrf.mxu0
        %614 = vdwg.mxu0
        %v615 = vmax.f32 %v577, 0.0
        %v616 = vmax.f32 %v582, 0.0
        %v617 = vmax.f32 %v587, 0.0
        %v618 = vmax.f32 %v592, 0.0
        %v619 = vmax.f32 %v597, 0.0
        %v620 = vmax.f32 %v602, 0.0
        %v621 = vmax.f32 %v607, 0.0
        %v622 = vmax.f32 %v612, 0.0
        %v623 = vld [vmem:[#allocation8] sm:$0xff]
        %v624 = vld [vmem:[#allocation8 + $0x8] sm:$0xff]
        %v625 = vld [vmem:[#allocation8 + $0x10] sm:$0xff]
        %v626 = vld [vmem:[#allocation8 + $0x18] sm:$0xff]
        %v627 = vld [vmem:[#allocation8 + $0x20] sm:$0xff]
        %v628 = vld [vmem:[#allocation8 + $0x28] sm:$0xff]
        %v629 = vld [vmem:[#allocation8 + $0x30] sm:$0xff]
        %v630 = vld [vmem:[#allocation8 + $0x38] sm:$0xff]
        %v631 = vld [vmem:[#allocation8 + $0x40] sm:$0xff]
        %v632 = vld [vmem:[#allocation8 + $0x48] sm:$0xff]
        %v633 = vld [vmem:[#allocation8 + $0x50] sm:$0xff]
        %v634 = vld [vmem:[#allocation8 + $0x58] sm:$0xff]
        %v635 = vld [vmem:[#allocation8 + $0x60] sm:$0xff]
        %v636 = vld [vmem:[#allocation8 + $0x68] sm:$0xff]
        %v637 = vld [vmem:[#allocation8 + $0x70] sm:$0xff]
        %v638 = vld [vmem:[#allocation8 + $0x78] sm:$0xff]
        %v639 = vld [vmem:[%s6] sm:$0x1]
        %v641 = vlaneseq
        %v642 = vshrl.u32 %v641, 7
        %v643 = vsub.s32 0, %v642
        %v644 = vrot.slane %v639, %v643
        %646 = vmatprep.subr.mxu0 0.0
        %647 = vmatpush1.msra.mxu0 %v638
        %648 = vmatprep.subr.mxu0 0.0
        %649 = vmatpush1.msra.mxu0 %v637
        %650 = vmatprep.subr.mxu0 0.0
        %651 = vmatpush1.msra.mxu0 %v636
        %652 = vmatprep.subr.mxu0 0.0
        %653 = vmatpush1.msra.mxu0 %v635
        %654 = vmatprep.subr.mxu0 0.0
        %655 = vmatpush1.msra.mxu0 %v634
        %656 = vmatprep.subr.mxu0 0.0
        %657 = vmatpush1.msra.mxu0 %v633
        %658 = vmatprep.subr.mxu0 0.0
        %659 = vmatpush1.msra.mxu0 %v632
        %660 = vmatprep.subr.mxu0 0.0
        %661 = vmatpush1.msra.mxu0 %v631
        %662 = vmatprep.subr.mxu0 0.0
        %663 = vmatpush1.msra.mxu0 %v630
        %664 = vmatprep.subr.mxu0 0.0
        %665 = vmatpush1.msra.mxu0 %v629
        %666 = vmatprep.subr.mxu0 0.0
        %667 = vmatpush1.msra.mxu0 %v628
        %668 = vmatprep.subr.mxu0 0.0
        %669 = vmatpush1.msra.mxu0 %v627
        %670 = vmatprep.subr.mxu0 0.0
        %671 = vmatpush1.msra.mxu0 %v626
        %672 = vmatprep.subr.mxu0 0.0
        %673 = vmatpush1.msra.mxu0 %v625
        %674 = vmatprep.subr.mxu0 0.0
        %675 = vmatpush1.msra.mxu0 %v624
        %676 = vmatprep.subr.mxu0 0.0
        %677 = vmatpush1.msra.mxu0 %v623
        %678 = vmatprep.subr.mxu0 0.0
        %679 = vmatpush2.msra.mxu0 0.0
        %680 = vmatprep.subr.mxu0 0.0
        %681 = vmatpush2.msra.mxu0 0.0
        %682 = vmatprep.subr.mxu0 0.0
        %683 = vmatpush2.msra.mxu0 0.0
        %684 = vmatprep.subr.mxu0 0.0
        %685 = vmatpush2.msra.mxu0 0.0
        %686 = vmatprep.subr.mxu0 0.0
        %687 = vmatpush2.msra.mxu0 0.0
        %688 = vmatprep.subr.mxu0 0.0
        %689 = vmatpush2.msra.mxu0 0.0
        %690 = vmatprep.subr.mxu0 0.0
        %691 = vmatpush2.msra.mxu0 0.0
        %692 = vmatprep.subr.mxu0 0.0
        %693 = vmatpush2.msra.mxu0 0.0
        %694 = vmatprep.subr.mxu0 0.0
        %695 = vmatpush2.msra.mxu0 0.0
        %696 = vmatprep.subr.mxu0 0.0
        %697 = vmatpush2.msra.mxu0 0.0
        %698 = vmatprep.subr.mxu0 0.0
        %699 = vmatpush2.msra.mxu0 0.0
        %700 = vmatprep.subr.mxu0 0.0
        %701 = vmatpush2.msra.mxu0 0.0
        %702 = vmatprep.subr.mxu0 0.0
        %703 = vmatpush2.msra.mxu0 0.0
        %704 = vmatprep.subr.mxu0 0.0
        %705 = vmatpush2.msra.mxu0 0.0
        %706 = vmatprep.subr.mxu0 0.0
        %707 = vmatpush2.msra.mxu0 0.0
        %708 = vmatprep.subr.mxu0 0.0
        %709 = vmatpush2.msra.mxu0 0.0
        %710 = vmatprep.mubr.f32.mxu0 0.0
        %711 = vmatmul.mubr.f32.gmra.mxu0 %v615
        %v712 = vpop.f32.mrf.mxu0
        %v713 = vadd.f32 %v644, %v712
        %v714 = vpop.f32.mrf.mxu0
        %715 = vmatprep.mubr.f32.mxu0 0.0
        %716 = vmatmul.mubr.f32.gmra.mxu0 %v616
        %v717 = vpop.f32.mrf.mxu0
        %v718 = vadd.f32 %v644, %v717
        %v719 = vpop.f32.mrf.mxu0
        %720 = vmatprep.mubr.f32.mxu0 0.0
        %721 = vmatmul.mubr.f32.gmra.mxu0 %v617
        %v722 = vpop.f32.mrf.mxu0
        %v723 = vadd.f32 %v644, %v722
        %v724 = vpop.f32.mrf.mxu0
        %725 = vmatprep.mubr.f32.mxu0 0.0
        %726 = vmatmul.mubr.f32.gmra.mxu0 %v618
        %v727 = vpop.f32.mrf.mxu0
        %v728 = vadd.f32 %v644, %v727
        %v729 = vpop.f32.mrf.mxu0
        %730 = vmatprep.mubr.f32.mxu0 0.0
        %731 = vmatmul.mubr.f32.gmra.mxu0 %v619
        %v732 = vpop.f32.mrf.mxu0
        %v733 = vadd.f32 %v644, %v732
        %v734 = vpop.f32.mrf.mxu0
        %735 = vmatprep.mubr.f32.mxu0 0.0
        %736 = vmatmul.mubr.f32.gmra.mxu0 %v620
        %v737 = vpop.f32.mrf.mxu0
        %v738 = vadd.f32 %v644, %v737
        %v739 = vpop.f32.mrf.mxu0
        %740 = vmatprep.mubr.f32.mxu0 0.0
        %741 = vmatmul.mubr.f32.gmra.mxu0 %v621
        %v742 = vpop.f32.mrf.mxu0
        %v743 = vadd.f32 %v644, %v742
        %v744 = vpop.f32.mrf.mxu0
        %745 = vmatprep.mubr.f32.mxu0 0.0
        %746 = vmatmul.mubr.f32.gmra.mxu0 %v622
        %v747 = vpop.f32.mrf.mxu0
        %v748 = vadd.f32 %v644, %v747
        %v749 = vpop.f32.mrf.mxu0
        %750 = vdwg.mxu0
        %751 = vst [vmem:[%s340] sm:$0xff] %v713
        %752 = vst [vmem:[%s340 + $0x8] sm:$0xff] %v718
        %753 = vst [vmem:[%s340 + $0x10] sm:$0xff] %v723
        %754 = vst [vmem:[%s340 + $0x18] sm:$0xff] %v728
        %755 = vst [vmem:[%s340 + $0x20] sm:$0xff] %v733
        %756 = vst [vmem:[%s340 + $0x28] sm:$0xff] %v738
        %757 = vst [vmem:[%s340 + $0x30] sm:$0xff] %v743
        %758 = vst [vmem:[%s340 + $0x38] sm:$0xff] %v748
        %s759 = sand.u32 %s186, 1
        %s760 = scalar_lea.sflag [#allocation4], %s759
        %s761 = sand.u32 %s186, 1
        %s762 = smul.addr %s761, 64
        %s763 = scalar_lea.vmem [#allocation10], %s762
        // Predicated region
        $region65: #{tpu_custom_call.1} parent=47 // pred_check
          %p764 = pneg %p196
        $region66: #{tpu_custom_call.1} parent=47 // pred_check_branch
          %766 = sbr.rel (%p764) target = $region68
        $region67: #{tpu_custom_call.1} parent=47 // pred_region
          %s767 = smul.u32 8, %s26
          %s769 = ssub.s32 1024, 1024
          %770 = vsyncadd %s760, %s769
          %s771 = smul.addr %s767, 128
          %s772 = scalar_lea.hbm %s7, %s771
          %s773 = sshll.u32 %s763, 4
          %s774 = int_to_ptr.vmem [resolvable:$true] %s773
          %779 = dma.vmem_to_hbm [thread:$0]  %s774, 1024, %s772, %s760, 128, 128, 8
        $region68: #{tpu_custom_call.1} parent=47 // pred_fallthru
          _
      $region48: #{tpu_custom_call.1} parent=5 // pred_fallthru
        _
      %p780 = scmp.le.s32.totalorder 2, %s21
      // Predicated region
      $region69: #{tpu_custom_call.1} parent=5 // pred_check
        %p781 = pneg %p780
      $region70: #{tpu_custom_call.1} parent=5 // pred_check_branch
        %783 = sbr.rel (%p781) target = $region72
      $region71: #{tpu_custom_call.1} parent=5 // pred_region
        %s784 = ssub.s32 %s21, 2
        // Predicated region
        $region73: #{tpu_custom_call.1} parent=71 // pred_check
          %p785 = pneg %p202
        $region74: #{tpu_custom_call.1} parent=71 // pred_check_branch
          %787 = sbr.rel (%p785) target = $region76
        $region75: #{tpu_custom_call.1} parent=71 // pred_region
          %s788 = sand.u32 %s187, 1
          %s789 = scalar_lea.sflag [#allocation4], %s788
          %s790 = sand.u32 %s187, 1
          %s791 = smul.addr %s790, 64
          %s792 = scalar_lea.vmem [#allocation10], %s791
          %793 = dma.done %s789, 1024
        $region76: #{tpu_custom_call.1} parent=71 // pred_fallthru
          _
      $region72: #{tpu_custom_call.1} parent=5 // pred_fallthru
        _
    $region6: #{tpu_custom_call.1} parent=1 // loop_footer
      %s25 = sadd.s32 1, %s21
    $region7: #{tpu_custom_call.1} parent=1 // loop_footer_branch
      %20 = sbr.rel target = $region3
    $region8: #{tpu_custom_call.1} parent=1 // loop_exit
      _
    %794 = vsyncpa [#allocation3], 1
    %s795 = scalar_lea.sflag [#allocation3], 1
    %796 = vsyncpa %s795, 1
    %797 = vsyncpa [#allocation6], 1
    %798 = vsyncpa [#allocation9], 1
    %799 = vsyncpa [#allocation4], 1
    %s800 = scalar_lea.sflag [#allocation4], 1
    %801 = vsyncpa %s800, 1

</llo_original>
